<compile_context>
chip_gen: v5e
topology: v5e:2x2
jax: 0.10.0
libtpu: 0.0.40
codegen_flags: <defaults>
</compile_context>

<pallas_src>
import jax
import jax.numpy as jnp
from jax.experimental import pallas as pl
from jax.experimental.pallas import tpu as pltpu


def _adversary_kernel(x_ref, wt_ref, b_ref, logp_ref, prob_ref):
    # Linear: logits = x @ W^T + b.  x / wt may be bf16 or f32; the MXU
    # accumulates in f32 via preferred_element_type.
    logits = jnp.dot(x_ref[...], wt_ref[...],
                     preferred_element_type=jnp.float32)
    logits = logits + b_ref[...].astype(jnp.float32)

    # Numerically-stable log-softmax along dim=1 (classes), all in f32.
    m = jnp.max(logits, axis=1, keepdims=True)
    shifted = logits - m
    lse = jnp.log(jnp.sum(jnp.exp(shifted), axis=1, keepdims=True))
    logp = shifted - lse

    logp_ref[...] = logp.astype(logp_ref.dtype)
    # prob = exp(logp): exact, consistent with logp, rows sum to 1; exp runs on
    # the EUP slot which has huge slack here.
    prob_ref[...] = jnp.exp(logp).astype(prob_ref.dtype)
    # NOTE: when B % tile_b != 0 the padded rows of the last tile may hold
    # garbage -> their exp can be inf/NaN in scratch lanes, but the masked
    # output writes discard them; results are unaffected.


def prepare_params(w, b):
    """One-time parameter prep: w (C, E) -> wt (E, C); b (C,) -> (1, C)."""
    return jnp.transpose(w), b.reshape(1, -1)


def extended_yaleb_adversary(x, wt, b2, *, tile_b=4096, force_pallas=False):
    """x: (B, E); wt: (E, C) pre-transposed weight; b2: (1, C) bias (f32).

    Returns (log_softmax(out1), x, softmax(out1)) matching the PyTorch module.
    """
    B, E = x.shape
    C = wt.shape[1]

    # Small-problem fallback: custom-call dispatch + one grid step cost more
    # than the math itself; let XLA fuse it with neighboring ops.
    if not force_pallas and B * E < 65536:
        logits = jnp.dot(x, wt, preferred_element_type=jnp.float32) + b2
        logp = jax.nn.log_softmax(logits, axis=1)
        prob = jnp.exp(logp)
        return logp.astype(x.dtype), x, prob.astype(x.dtype)

    # ---- batch-tile selection -------------------------------------------
    # Large tiles amortize the ~0.35us per-grid-step overhead; multiple of 8
    # (f32 sublanes).
    tile_b = max(8, (min(tile_b, 8192) // 8) * 8)
    if B <= tile_b:
        if B >= 1024:
            # Keep >= 2 grid steps so v7x's two TensorCores both get work and
            # the input/output double-buffer pipeline stays active.
            tile_b = max(8, ((pl.cdiv(B, 2) + 7) // 8) * 8)
        else:
            tile_b = B  # block_shape equal to the full dim is always legal

    # ---- VMEM budget (explicit so a v6e-tuned tile can't OOM on v7x/v5e) --
    # double-buffered x tile + 2 double-buffered f32 outputs + resident params.
    in_isz = jnp.dtype(x.dtype).itemsize
    w_isz = jnp.dtype(wt.dtype).itemsize
    def _vmem(tb):
        return (2 * tb * E * in_isz          # x (double-buffered)
                + 2 * 2 * tb * C * 4         # logp + prob (double-buffered)
                + E * C * w_isz + C * 4)     # resident weight + bias
    VMEM_BUDGET = 12 << 20   # v5e default scoped VMEM is 16 MiB -> stay under
    while tile_b > 8 and _vmem(tile_b) > VMEM_BUDGET:
        tile_b = max(8, (tile_b // 2 // 8) * 8)

    grid = (pl.cdiv(B, tile_b),)

    cost = pl.CostEstimate(
        flops=2 * B * E * C,
        transcendentals=B * (2 * C + 1),                  # exp (x2) + log
        bytes_accessed=B * E * in_isz + 2 * B * C * in_isz + E * C * w_isz + C * 4,
    )

    logp, prob = pl.pallas_call(
        _adversary_kernel,
        out_shape=(
            jax.ShapeDtypeStruct((B, C), x.dtype),        # log-softmax
            jax.ShapeDtypeStruct((B, C), x.dtype),        # softmax probs
        ),
        grid=grid,
        in_specs=[
            pl.BlockSpec((tile_b, E), lambda i: (i, 0)),  # x tile, pipelined
            pl.BlockSpec((E, C), lambda i: (0, 0)),       # weight, resident
            pl.BlockSpec((1, C), lambda i: (0, 0)),       # bias, resident
        ],
        out_specs=(
            pl.BlockSpec((tile_b, C), lambda i: (i, 0)),
            pl.BlockSpec((tile_b, C), lambda i: (i, 0)),
        ),
        compiler_params=pltpu.CompilerParams(
            dimension_semantics=("parallel",)),           # v7x: both TCs
        cost_estimate=cost,
    )(x, wt, b2)

    # z is a pure identity of the input; return x directly (no copy).
    return logp, x, prob


def _init_linear_params(key, num_classes, embed_length):
    # Deterministic init mimicking nn.Linear default: U(-1/sqrt(E), 1/sqrt(E)).
    kw, kb = jax.random.split(key)
    bound = 1.0 / jnp.sqrt(jnp.float32(embed_length))
    w = jax.random.uniform(kw, (num_classes, embed_length), jnp.float32,
                           minval=-bound, maxval=bound)
    b = jax.random.uniform(kb, (num_classes,), jnp.float32,
                           minval=-bound, maxval=bound)
    return w, b


if __name__ == "__main__":
    key = jax.random.PRNGKey(0)
    k_x, k_p = jax.random.split(key)

    batch = 128
    embed_length = 32
    num_classes = 5

    x = jax.random.normal(k_x, (batch, embed_length), jnp.float32)
    w, b = _init_linear_params(k_p, num_classes, embed_length)

    # One-time parameter prep (kept off the per-call dispatch path).
    wt, b2 = prepare_params(w, b)

    # Force the Pallas path so the kernel itself is exercised at this size.
    logp, z, prob = extended_yaleb_adversary(x, wt, b2, force_pallas=True)
    jax.block_until_ready((logp, z, prob))

    # Sanity check against plain-JAX reference (exact prob path -> tight tol).
    logits_ref = x @ w.T + b
    prob_ref = jax.nn.softmax(logits_ref, axis=1)
    logp_ref = jax.nn.log_softmax(logits_ref, axis=1)
    assert jnp.allclose(prob, prob_ref, atol=1e-5, rtol=1e-5), "softmax mismatch"
    assert jnp.allclose(logp, logp_ref, atol=1e-5, rtol=1e-5), "log-softmax mismatch"
    assert jnp.allclose(jnp.sum(prob, axis=1), 1.0, atol=1e-5), "prob rows must sum to 1"
    assert z is x or bool(jnp.all(z == x)), "z passthrough mismatch"

    # Also exercise the fused small-batch fallback path.
    logp_s, z_s, prob_s = extended_yaleb_adversary(x[:8], wt, b2)
    jax.block_until_ready((logp_s, prob_s))
    assert jnp.allclose(logp_s, logp_ref[:8], atol=1e-5, rtol=1e-5)
    assert jnp.allclose(prob_s, prob_ref[:8], atol=1e-5, rtol=1e-5)

    print("KERNEL_OK")
</pallas_src>

<mosaic_0001>
module attributes {stable_mosaic.version = 11 : i64} {
  func.func @_adversary_kernel(%arg0: i32, %arg1: memref<128x32xf32, #tpu.memory_space<vmem>>, %arg2: memref<32x5xf32, #tpu.memory_space<vmem>>, %arg3: memref<1x5xf32, #tpu.memory_space<vmem>>, %arg4: memref<128x5xf32, #tpu.memory_space<vmem>>, %arg5: memref<128x5xf32, #tpu.memory_space<vmem>>) attributes {dimension_semantics = [#tpu.dimension_semantics<parallel>], iteration_bounds = array<i64: 1>, scalar_prefetch = 0 : i64, scratch_operands = 0 : i64, tpu.core_type = #tpu.core_type<tc>, window_params = [{transform_indices = @transform_0, window_bounds = array<i64: 128, 32>}, {pipeline_mode = #tpu.pipeline_mode<synchronous>, transform_indices = @transform_1, window_bounds = array<i64: 32, 5>}, {pipeline_mode = #tpu.pipeline_mode<synchronous>, transform_indices = @transform_2, window_bounds = array<i64: 1, 5>}, {transform_indices = @transform_3, window_bounds = array<i64: 128, 5>}, {transform_indices = @transform_4, window_bounds = array<i64: 128, 5>}]} {
    %c0 = arith.constant 0 : index
    %c0_0 = arith.constant 0 : index
    %0 = vector.load %arg1[%c0, %c0_0] : memref<128x32xf32, #tpu.memory_space<vmem>>, vector<128x32xf32>
    %c0_1 = arith.constant 0 : index
    %c0_2 = arith.constant 0 : index
    %1 = vector.load %arg2[%c0_1, %c0_2] : memref<32x5xf32, #tpu.memory_space<vmem>>, vector<32x5xf32>
    %cst = arith.constant dense<0.000000e+00> : vector<128x5xf32>
    %2 = tpu.matmul %0, %1, %cst {dimension_numbers = #tpu.dot_dimension_numbers<[1], [0], [0], [1], [0, 0, 1, 1], [], []>} : vector<128x32xf32>, vector<32x5xf32>, vector<128x5xf32> -> vector<128x5xf32>
    %c0_3 = arith.constant 0 : index
    %c0_4 = arith.constant 0 : index
    %3 = vector.load %arg3[%c0_3, %c0_4] : memref<1x5xf32, #tpu.memory_space<vmem>>, vector<1x5xf32>
    %4 = vector.broadcast %3 : vector<1x5xf32> to vector<128x5xf32>
    %5 = arith.addf %2, %4 : vector<128x5xf32>
    %cst_5 = arith.constant dense<0xFF800000> : vector<128xf32>
    %6 = vector.multi_reduction <maximumf>, %5, %cst_5 [1] : vector<128x5xf32> to vector<128xf32>
    %7 = vector.shape_cast %6 : vector<128xf32> to vector<128x1xf32>
    %8 = vector.broadcast %7 : vector<128x1xf32> to vector<128x5xf32>
    %9 = arith.subf %5, %8 : vector<128x5xf32>
    %10 = math.exp %9 : vector<128x5xf32>
    %cst_6 = arith.constant dense<0.000000e+00> : vector<128xf32>
    %11 = vector.multi_reduction <add>, %10, %cst_6 [1] : vector<128x5xf32> to vector<128xf32>
    %12 = vector.shape_cast %11 : vector<128xf32> to vector<128x1xf32>
    %13 = math.log %12 : vector<128x1xf32>
    %14 = vector.broadcast %13 : vector<128x1xf32> to vector<128x5xf32>
    %15 = arith.subf %9, %14 : vector<128x5xf32>
    %c0_7 = arith.constant 0 : index
    %c0_8 = arith.constant 0 : index
    %16 = vector.load %arg4[%c0_7, %c0_8] : memref<128x5xf32, #tpu.memory_space<vmem>>, vector<128x5xf32>
    tpu.vector_store %arg4[%c0_7, %c0_8], %15 {strides = array<i32>} : memref<128x5xf32, #tpu.memory_space<vmem>>, vector<128x5xf32>,
    %17 = math.exp %15 : vector<128x5xf32>
    %c0_9 = arith.constant 0 : index
    %c0_10 = arith.constant 0 : index
    %18 = vector.load %arg5[%c0_9, %c0_10] : memref<128x5xf32, #tpu.memory_space<vmem>>, vector<128x5xf32>
    tpu.vector_store %arg5[%c0_9, %c0_10], %17 {strides = array<i32>} : memref<128x5xf32, #tpu.memory_space<vmem>>, vector<128x5xf32>,
    return
  }
  func.func @transform_0(%arg0: i32) -> (i32, i32) {
    %c0_i32 = arith.constant 0 : i32
    %c0_i32_0 = arith.constant 0 : i32
    return %arg0, %c0_i32 : i32, i32
  }
  func.func @transform_1(%arg0: i32) -> (i32, i32) {
    %c0_i32 = arith.constant 0 : i32
    %c0_i32_0 = arith.constant 0 : i32
    %c0_i32_1 = arith.constant 0 : i32
    return %c0_i32, %c0_i32_0 : i32, i32
  }
  func.func @transform_2(%arg0: i32) -> (i32, i32) {
    %c0_i32 = arith.constant 0 : i32
    %c0_i32_0 = arith.constant 0 : i32
    %c0_i32_1 = arith.constant 0 : i32
    return %c0_i32, %c0_i32_0 : i32, i32
  }
  func.func @transform_3(%arg0: i32) -> (i32, i32) {
    %c0_i32 = arith.constant 0 : i32
    %c0_i32_0 = arith.constant 0 : i32
    return %arg0, %c0_i32 : i32, i32
  }
  func.func @transform_4(%arg0: i32) -> (i32, i32) {
    %c0_i32 = arith.constant 0 : i32
    %c0_i32_0 = arith.constant 0 : i32
    return %arg0, %c0_i32 : i32, i32
  }
}

</mosaic_0001>

<llo_original>
// kernel: tpu_custom_call.1
$region0: #{tpu_custom_call.1}
  #allocation0 [shape = 'u32[]', space=smem, size = 0x4, offset = 0x4, fixed_abs, tag = 'smem constant byte address 0x4 - core index']
  #allocation1 [shape = 'u32[72,128]{1,0:T(1,128)}', space=vmem, size = 0x9000, scoped, tag = 'internal scratch']
  %s0 = inlined_call_operand.vmem [shape: f32[128,32], index: 0, kind: input, shape index: {}]
  %s1 = inlined_call_operand.vmem [shape: f32[32,5], index: 1, kind: input, shape index: {}]
  %s2 = inlined_call_operand.vmem [shape: f32[1,5], index: 2, kind: input, shape index: {}]
  %s3 = inlined_call_operand.vmem [shape: f32[128,5], index: 3, kind: output, shape index: {0}]
  %s4 = inlined_call_operand.vmem [shape: f32[128,5], index: 4, kind: output, shape index: {1}]
  %5 = xla_tuple %s3, %s4
  %s6 = sld [smem:[#allocation0]]
  $region30: #{tpu_custom_call.1} parent=0
    _
  %s8 = ssub.s32 1, %s6
  %s9 = scalar_select 0, %s8, %s6
  // Predicated region
  $region2: #{tpu_custom_call.1} parent=0 // pred_check
    _
  $region3: #{tpu_custom_call.1} parent=0 // pred_check_branch
    %11 = sbr.rel (0) target = $region5
  $region4: #{tpu_custom_call.1} parent=0 // pred_region
    _
  $region5: #{tpu_custom_call.1} parent=0 // pred_fallthru
    _
  // Predicated region
  $region6: #{tpu_custom_call.1} parent=0 // pred_check
    _
  $region7: #{tpu_custom_call.1} parent=0 // pred_check_branch
    %13 = sbr.rel (0) target = $region9
  $region8: #{tpu_custom_call.1} parent=0 // pred_region
    _
  $region9: #{tpu_custom_call.1} parent=0 // pred_fallthru
    _
  // Predicated region
  $region10: #{tpu_custom_call.1} parent=0 // pred_check
    _
  $region11: #{tpu_custom_call.1} parent=0 // pred_check_branch
    %15 = sbr.rel (0) target = $region13
  $region12: #{tpu_custom_call.1} parent=0 // pred_region
    _
  $region13: #{tpu_custom_call.1} parent=0 // pred_fallthru
    _
  %v16 = vld [vmem:[%s0] sm:$0xff]
  %v17 = vld [vmem:[%s0 + $0x8] sm:$0xff]
  %v18 = vld [vmem:[%s0 + $0x10] sm:$0xff]
  %v19 = vld [vmem:[%s0 + $0x18] sm:$0xff]
  %v20 = vld [vmem:[%s0 + $0x20] sm:$0xff]
  %v21 = vld [vmem:[%s0 + $0x28] sm:$0xff]
  %v22 = vld [vmem:[%s0 + $0x30] sm:$0xff]
  %v23 = vld [vmem:[%s0 + $0x38] sm:$0xff]
  %v24 = vld [vmem:[%s0 + $0x40] sm:$0xff]
  %v25 = vld [vmem:[%s0 + $0x48] sm:$0xff]
  %v26 = vld [vmem:[%s0 + $0x50] sm:$0xff]
  %v27 = vld [vmem:[%s0 + $0x58] sm:$0xff]
  %v28 = vld [vmem:[%s0 + $0x60] sm:$0xff]
  %v29 = vld [vmem:[%s0 + $0x68] sm:$0xff]
  %v30 = vld [vmem:[%s0 + $0x70] sm:$0xff]
  %v31 = vld [vmem:[%s0 + $0x78] sm:$0xff]
  %v32 = vld [vmem:[%s1] sm:$0xff]
  %v33 = vld [vmem:[%s1 + $0x8] sm:$0xff]
  %v34 = vld [vmem:[%s1 + $0x10] sm:$0xff]
  %v35 = vld [vmem:[%s1 + $0x18] sm:$0xff]
  %v36 = vld [vmem:[%s2] sm:$0x1]
  %v38 = vperm.slane %v36, 0
  %vm40 = vcmask 261120
  %v42 = vsel %vm40, %v16, 0
  %v45 = vsel %vm40, %v17, 0
  %v48 = vsel %vm40, %v18, 0
  %v51 = vsel %vm40, %v19, 0
  %v54 = vsel %vm40, %v20, 0
  %v57 = vsel %vm40, %v21, 0
  %v60 = vsel %vm40, %v22, 0
  %v63 = vsel %vm40, %v23, 0
  %v66 = vsel %vm40, %v24, 0
  %v69 = vsel %vm40, %v25, 0
  %v72 = vsel %vm40, %v26, 0
  %v75 = vsel %vm40, %v27, 0
  %v78 = vsel %vm40, %v28, 0
  %v81 = vsel %vm40, %v29, 0
  %v84 = vsel %vm40, %v30, 0
  %v87 = vsel %vm40, %v31, 0
  %89 = vmatpush.msra.mxu0 0.0
  %90 = vmatpush.msra.mxu0 0.0
  %91 = vmatpush.msra.mxu0 0.0
  %92 = vmatpush.msra.mxu0 0.0
  %93 = vmatpush.msra.mxu0 0.0
  %94 = vmatpush.msra.mxu0 0.0
  %95 = vmatpush.msra.mxu0 0.0
  %96 = vmatpush.msra.mxu0 0.0
  %97 = vmatpush.msra.mxu0 0.0
  %98 = vmatpush.msra.mxu0 0.0
  %99 = vmatpush.msra.mxu0 0.0
  %100 = vmatpush.msra.mxu0 0.0
  %101 = vmatpush.msra.mxu0 %v35
  %102 = vmatpush.msra.mxu0 %v34
  %103 = vmatpush.msra.mxu0 %v33
  %104 = vmatpush.msra.mxu0 %v32
  %105 = vmatmul.f32.gmra.mxu0 %v42
  %v106 = vpop.f32.mrf.mxu0
  %v107 = vadd.f32 %v38, %v106
  %108 = vmatmul.f32.gmra.mxu0 %v45
  %v109 = vpop.f32.mrf.mxu0
  %v110 = vadd.f32 %v38, %v109
  %111 = vmatmul.f32.gmra.mxu0 %v48
  %v112 = vpop.f32.mrf.mxu0
  %v113 = vadd.f32 %v38, %v112
  %114 = vmatmul.f32.gmra.mxu0 %v51
  %v115 = vpop.f32.mrf.mxu0
  %v116 = vadd.f32 %v38, %v115
  %117 = vmatmul.f32.gmra.mxu0 %v54
  %v118 = vpop.f32.mrf.mxu0
  %v119 = vadd.f32 %v38, %v118
  %120 = vmatmul.f32.gmra.mxu0 %v57
  %v121 = vpop.f32.mrf.mxu0
  %v122 = vadd.f32 %v38, %v121
  %123 = vmatmul.f32.gmra.mxu0 %v60
  %v124 = vpop.f32.mrf.mxu0
  %v125 = vadd.f32 %v38, %v124
  %126 = vmatmul.f32.gmra.mxu0 %v63
  %v127 = vpop.f32.mrf.mxu0
  %v128 = vadd.f32 %v38, %v127
  %129 = vmatmul.f32.gmra.mxu0 %v66
  %v130 = vpop.f32.mrf.mxu0
  %v131 = vadd.f32 %v38, %v130
  %132 = vmatmul.f32.gmra.mxu0 %v69
  %v133 = vpop.f32.mrf.mxu0
  %v134 = vadd.f32 %v38, %v133
  %135 = vmatmul.f32.gmra.mxu0 %v72
  %v136 = vpop.f32.mrf.mxu0
  %v137 = vadd.f32 %v38, %v136
  %138 = vmatmul.f32.gmra.mxu0 %v75
  %v139 = vpop.f32.mrf.mxu0
  %v140 = vadd.f32 %v38, %v139
  %141 = vmatmul.f32.gmra.mxu0 %v78
  %v142 = vpop.f32.mrf.mxu0
  %v143 = vadd.f32 %v38, %v142
  %144 = vmatmul.f32.gmra.mxu0 %v81
  %v145 = vpop.f32.mrf.mxu0
  %v146 = vadd.f32 %v38, %v145
  %147 = vmatmul.f32.gmra.mxu0 %v84
  %v148 = vpop.f32.mrf.mxu0
  %v149 = vadd.f32 %v38, %v148
  %150 = vmatmul.f32.gmra.mxu0 %v87
  %v151 = vpop.f32.mrf.mxu0
  %v152 = vadd.f32 %v38, %v151
  %153 = vdwg.mxu0
  %vm154 = vcmask 39936
  %v155 = vsel %vm154, %v107, -inf
  %156 = vmax.xlane.f32.xlu0 %v155
  %v157 = vpop.xlane.xlu0 %156
  %v158 = vsel %vm154, %v110, -inf
  %159 = vmax.xlane.f32.xlu0 %v158
  %v160 = vpop.xlane.xlu0 %159
  %v161 = vsel %vm154, %v113, -inf
  %162 = vmax.xlane.f32.xlu0 %v161
  %v163 = vpop.xlane.xlu0 %162
  %v164 = vsel %vm154, %v116, -inf
  %165 = vmax.xlane.f32.xlu0 %v164
  %v166 = vpop.xlane.xlu0 %165
  %v167 = vsel %vm154, %v119, -inf
  %168 = vmax.xlane.f32.xlu0 %v167
  %v169 = vpop.xlane.xlu0 %168
  %v170 = vsel %vm154, %v122, -inf
  %171 = vmax.xlane.f32.xlu0 %v170
  %v172 = vpop.xlane.xlu0 %171
  %v173 = vsel %vm154, %v125, -inf
  %174 = vmax.xlane.f32.xlu0 %v173
  %v175 = vpop.xlane.xlu0 %174
  %v176 = vsel %vm154, %v128, -inf
  %177 = vmax.xlane.f32.xlu0 %v176
  %v178 = vpop.xlane.xlu0 %177
  %v179 = vsel %vm154, %v131, -inf
  %180 = vmax.xlane.f32.xlu0 %v179
  %v181 = vpop.xlane.xlu0 %180
  %v182 = vsel %vm154, %v134, -inf
  %183 = vmax.xlane.f32.xlu0 %v182
  %v184 = vpop.xlane.xlu0 %183
  %v185 = vsel %vm154, %v137, -inf
  %186 = vmax.xlane.f32.xlu0 %v185
  %v187 = vpop.xlane.xlu0 %186
  %v188 = vsel %vm154, %v140, -inf
  %189 = vmax.xlane.f32.xlu0 %v188
  %v190 = vpop.xlane.xlu0 %189
  %v191 = vsel %vm154, %v143, -inf
  %192 = vmax.xlane.f32.xlu0 %v191
  %v193 = vpop.xlane.xlu0 %192
  %v194 = vsel %vm154, %v146, -inf
  %195 = vmax.xlane.f32.xlu0 %v194
  %v196 = vpop.xlane.xlu0 %195
  %v197 = vsel %vm154, %v149, -inf
  %198 = vmax.xlane.f32.xlu0 %v197
  %v199 = vpop.xlane.xlu0 %198
  %v200 = vsel %vm154, %v152, -inf
  %201 = vmax.xlane.f32.xlu0 %v200
  %v202 = vpop.xlane.xlu0 %201
  %v203 = vsub.f32 %v107, %v157
  %v204 = vsub.f32 %v110, %v160
  %v205 = vsub.f32 %v113, %v163
  %v206 = vsub.f32 %v116, %v166
  %v207 = vsub.f32 %v119, %v169
  %v208 = vsub.f32 %v122, %v172
  %v209 = vsub.f32 %v125, %v175
  %v210 = vsub.f32 %v128, %v178
  %v211 = vsub.f32 %v131, %v181
  %v212 = vsub.f32 %v134, %v184
  %v213 = vsub.f32 %v137, %v187
  %v214 = vsub.f32 %v140, %v190
  %v215 = vsub.f32 %v143, %v193
  %v216 = vsub.f32 %v146, %v196
  %v217 = vsub.f32 %v149, %v199
  %v218 = vsub.f32 %v152, %v202
  %v219 = vmul.f32 %v203, 1.442695
  %v220 = vpow.pop %v219
  %v221 = vmul.f32 %v204, 1.442695
  %v222 = vpow.pop %v221
  %v223 = vmul.f32 %v205, 1.442695
  %v224 = vpow.pop %v223
  %v225 = vmul.f32 %v206, 1.442695
  %v226 = vpow.pop %v225
  %v227 = vmul.f32 %v207, 1.442695
  %v228 = vpow.pop %v227
  %v229 = vmul.f32 %v208, 1.442695
  %v230 = vpow.pop %v229
  %v231 = vmul.f32 %v209, 1.442695
  %v232 = vpow.pop %v231
  %v233 = vmul.f32 %v210, 1.442695
  %v234 = vpow.pop %v233
  %v235 = vmul.f32 %v211, 1.442695
  %v236 = vpow.pop %v235
  %v237 = vmul.f32 %v212, 1.442695
  %v238 = vpow.pop %v237
  %v239 = vmul.f32 %v213, 1.442695
  %v240 = vpow.pop %v239
  %v241 = vmul.f32 %v214, 1.442695
  %v242 = vpow.pop %v241
  %v243 = vmul.f32 %v215, 1.442695
  %v244 = vpow.pop %v243
  %v245 = vmul.f32 %v216, 1.442695
  %v246 = vpow.pop %v245
  %v247 = vmul.f32 %v217, 1.442695
  %v248 = vpow.pop %v247
  %v249 = vmul.f32 %v218, 1.442695
  %v250 = vpow.pop %v249
  %v251 = vsel %vm154, %v220, 0.0
  %252 = vadd.xlane.f32.xlu0 %v251
  %v253 = vpop.xlane.xlu0 %252
  %v254 = vsel %vm154, %v222, 0.0
  %255 = vadd.xlane.f32.xlu0 %v254
  %v256 = vpop.xlane.xlu0 %255
  %v257 = vsel %vm154, %v224, 0.0
  %258 = vadd.xlane.f32.xlu0 %v257
  %v259 = vpop.xlane.xlu0 %258
  %v260 = vsel %vm154, %v226, 0.0
  %261 = vadd.xlane.f32.xlu0 %v260
  %v262 = vpop.xlane.xlu0 %261
  %v263 = vsel %vm154, %v228, 0.0
  %264 = vadd.xlane.f32.xlu0 %v263
  %v265 = vpop.xlane.xlu0 %264
  %v266 = vsel %vm154, %v230, 0.0
  %267 = vadd.xlane.f32.xlu0 %v266
  %v268 = vpop.xlane.xlu0 %267
  %v269 = vsel %vm154, %v232, 0.0
  %270 = vadd.xlane.f32.xlu0 %v269
  %v271 = vpop.xlane.xlu0 %270
  %v272 = vsel %vm154, %v234, 0.0
  %273 = vadd.xlane.f32.xlu0 %v272
  %v274 = vpop.xlane.xlu0 %273
  %v275 = vsel %vm154, %v236, 0.0
  %276 = vadd.xlane.f32.xlu0 %v275
  %v277 = vpop.xlane.xlu0 %276
  %v278 = vsel %vm154, %v238, 0.0
  %279 = vadd.xlane.f32.xlu0 %v278
  %v280 = vpop.xlane.xlu0 %279
  %v281 = vsel %vm154, %v240, 0.0
  %282 = vadd.xlane.f32.xlu0 %v281
  %v283 = vpop.xlane.xlu0 %282
  %v284 = vsel %vm154, %v242, 0.0
  %285 = vadd.xlane.f32.xlu0 %v284
  %v286 = vpop.xlane.xlu0 %285
  %v287 = vsel %vm154, %v244, 0.0
  %288 = vadd.xlane.f32.xlu0 %v287
  %v289 = vpop.xlane.xlu0 %288
  %v290 = vsel %vm154, %v246, 0.0
  %291 = vadd.xlane.f32.xlu0 %v290
  %v292 = vpop.xlane.xlu0 %291
  %v293 = vsel %vm154, %v248, 0.0
  %294 = vadd.xlane.f32.xlu0 %v293
  %v295 = vpop.xlane.xlu0 %294
  %v296 = vsel %vm154, %v250, 0.0
  %297 = vadd.xlane.f32.xlu0 %v296
  %v298 = vpop.xlane.xlu0 %297
  %v299 = vlog2.pop %v253
  %v300 = vmul.f32 %v299, 0.6931472
  %v301 = vlog2.pop %v256
  %v302 = vmul.f32 %v301, 0.6931472
  %v303 = vlog2.pop %v259
  %v304 = vmul.f32 %v303, 0.6931472
  %v305 = vlog2.pop %v262
  %v306 = vmul.f32 %v305, 0.6931472
  %v307 = vlog2.pop %v265
  %v308 = vmul.f32 %v307, 0.6931472
  %v309 = vlog2.pop %v268
  %v310 = vmul.f32 %v309, 0.6931472
  %v311 = vlog2.pop %v271
  %v312 = vmul.f32 %v311, 0.6931472
  %v313 = vlog2.pop %v274
  %v314 = vmul.f32 %v313, 0.6931472
  %v315 = vlog2.pop %v277
  %v316 = vmul.f32 %v315, 0.6931472
  %v317 = vlog2.pop %v280
  %v318 = vmul.f32 %v317, 0.6931472
  %v319 = vlog2.pop %v283
  %v320 = vmul.f32 %v319, 0.6931472
  %v321 = vlog2.pop %v286
  %v322 = vmul.f32 %v321, 0.6931472
  %v323 = vlog2.pop %v289
  %v324 = vmul.f32 %v323, 0.6931472
  %v325 = vlog2.pop %v292
  %v326 = vmul.f32 %v325, 0.6931472
  %v327 = vlog2.pop %v295
  %v328 = vmul.f32 %v327, 0.6931472
  %v329 = vlog2.pop %v298
  %v330 = vmul.f32 %v329, 0.6931472
  %v331 = vsub.f32 %v203, %v300
  %v332 = vsub.f32 %v204, %v302
  %v333 = vsub.f32 %v205, %v304
  %v334 = vsub.f32 %v206, %v306
  %v335 = vsub.f32 %v207, %v308
  %v336 = vsub.f32 %v208, %v310
  %v337 = vsub.f32 %v209, %v312
  %v338 = vsub.f32 %v210, %v314
  %v339 = vsub.f32 %v211, %v316
  %v340 = vsub.f32 %v212, %v318
  %v341 = vsub.f32 %v213, %v320
  %v342 = vsub.f32 %v214, %v322
  %v343 = vsub.f32 %v215, %v324
  %v344 = vsub.f32 %v216, %v326
  %v345 = vsub.f32 %v217, %v328
  %v346 = vsub.f32 %v218, %v330
  %347 = vst.msk [vmem:[%s3] sm:$0xff] %vm154, %v331
  %348 = vst.msk [vmem:[%s3 + $0x8] sm:$0xff] %vm154, %v332
  %349 = vst.msk [vmem:[%s3 + $0x10] sm:$0xff] %vm154, %v333
  %350 = vst.msk [vmem:[%s3 + $0x18] sm:$0xff] %vm154, %v334
  %351 = vst.msk [vmem:[%s3 + $0x20] sm:$0xff] %vm154, %v335
  %352 = vst.msk [vmem:[%s3 + $0x28] sm:$0xff] %vm154, %v336
  %353 = vst.msk [vmem:[%s3 + $0x30] sm:$0xff] %vm154, %v337
  %354 = vst.msk [vmem:[%s3 + $0x38] sm:$0xff] %vm154, %v338
  %355 = vst.msk [vmem:[%s3 + $0x40] sm:$0xff] %vm154, %v339
  %356 = vst.msk [vmem:[%s3 + $0x48] sm:$0xff] %vm154, %v340
  %357 = vst.msk [vmem:[%s3 + $0x50] sm:$0xff] %vm154, %v341
  %358 = vst.msk [vmem:[%s3 + $0x58] sm:$0xff] %vm154, %v342
  %359 = vst.msk [vmem:[%s3 + $0x60] sm:$0xff] %vm154, %v343
  %360 = vst.msk [vmem:[%s3 + $0x68] sm:$0xff] %vm154, %v344
  %361 = vst.msk [vmem:[%s3 + $0x70] sm:$0xff] %vm154, %v345
  %362 = vst.msk [vmem:[%s3 + $0x78] sm:$0xff] %vm154, %v346
  %v363 = vmul.f32 %v331, 1.442695
  %v364 = vpow.pop %v363
  %v365 = vmul.f32 %v332, 1.442695
  %v366 = vpow.pop %v365
  %v367 = vmul.f32 %v333, 1.442695
  %v368 = vpow.pop %v367
  %v369 = vmul.f32 %v334, 1.442695
  %v370 = vpow.pop %v369
  %v371 = vmul.f32 %v335, 1.442695
  %v372 = vpow.pop %v371
  %v373 = vmul.f32 %v336, 1.442695
  %v374 = vpow.pop %v373
  %v375 = vmul.f32 %v337, 1.442695
  %v376 = vpow.pop %v375
  %v377 = vmul.f32 %v338, 1.442695
  %v378 = vpow.pop %v377
  %v379 = vmul.f32 %v339, 1.442695
  %v380 = vpow.pop %v379
  %v381 = vmul.f32 %v340, 1.442695
  %v382 = vpow.pop %v381
  %v383 = vmul.f32 %v341, 1.442695
  %v384 = vpow.pop %v383
  %v385 = vmul.f32 %v342, 1.442695
  %v386 = vpow.pop %v385
  %v387 = vmul.f32 %v343, 1.442695
  %v388 = vpow.pop %v387
  %v389 = vmul.f32 %v344, 1.442695
  %v390 = vpow.pop %v389
  %v391 = vmul.f32 %v345, 1.442695
  %v392 = vpow.pop %v391
  %v393 = vmul.f32 %v346, 1.442695
  %v394 = vpow.pop %v393
  %395 = vst.msk [vmem:[%s4] sm:$0xff] %vm154, %v364
  %396 = vst.msk [vmem:[%s4 + $0x8] sm:$0xff] %vm154, %v366
  %397 = vst.msk [vmem:[%s4 + $0x10] sm:$0xff] %vm154, %v368
  %398 = vst.msk [vmem:[%s4 + $0x18] sm:$0xff] %vm154, %v370
  %399 = vst.msk [vmem:[%s4 + $0x20] sm:$0xff] %vm154, %v372
  %400 = vst.msk [vmem:[%s4 + $0x28] sm:$0xff] %vm154, %v374
  %401 = vst.msk [vmem:[%s4 + $0x30] sm:$0xff] %vm154, %v376
  %402 = vst.msk [vmem:[%s4 + $0x38] sm:$0xff] %vm154, %v378
  %403 = vst.msk [vmem:[%s4 + $0x40] sm:$0xff] %vm154, %v380
  %404 = vst.msk [vmem:[%s4 + $0x48] sm:$0xff] %vm154, %v382
  %405 = vst.msk [vmem:[%s4 + $0x50] sm:$0xff] %vm154, %v384
  %406 = vst.msk [vmem:[%s4 + $0x58] sm:$0xff] %vm154, %v386
  %407 = vst.msk [vmem:[%s4 + $0x60] sm:$0xff] %vm154, %v388
  %408 = vst.msk [vmem:[%s4 + $0x68] sm:$0xff] %vm154, %v390
  %409 = vst.msk [vmem:[%s4 + $0x70] sm:$0xff] %vm154, %v392
  %410 = vst.msk [vmem:[%s4 + $0x78] sm:$0xff] %vm154, %v394
  // Predicated region
  $region14: #{tpu_custom_call.1} parent=0 // pred_check
    _
  $region15: #{tpu_custom_call.1} parent=0 // pred_check_branch
    %412 = sbr.rel (0) target = $region17
  $region16: #{tpu_custom_call.1} parent=0 // pred_region
    _
  $region17: #{tpu_custom_call.1} parent=0 // pred_fallthru
    _
  // Predicated region
  $region18: #{tpu_custom_call.1} parent=0 // pred_check
    _
  $region19: #{tpu_custom_call.1} parent=0 // pred_check_branch
    %414 = sbr.rel (0) target = $region21
  $region20: #{tpu_custom_call.1} parent=0 // pred_region
    _
  $region21: #{tpu_custom_call.1} parent=0 // pred_fallthru
    _
  // Predicated region
  $region22: #{tpu_custom_call.1} parent=0 // pred_check
    _
  $region23: #{tpu_custom_call.1} parent=0 // pred_check_branch
    %416 = sbr.rel (0) target = $region25
  $region24: #{tpu_custom_call.1} parent=0 // pred_region
    _
  $region25: #{tpu_custom_call.1} parent=0 // pred_fallthru
    _
  // Predicated region
  $region26: #{tpu_custom_call.1} parent=0 // pred_check
    _
  $region27: #{tpu_custom_call.1} parent=0 // pred_check_branch
    %418 = sbr.rel (0) target = $region29
  $region28: #{tpu_custom_call.1} parent=0 // pred_region
    _
  $region29: #{tpu_custom_call.1} parent=0 // pred_fallthru
    _

</llo_original>
